<compile_context>
chip_gen: v6e
topology: v6e:2x2x1
jax: 0.10.0
libtpu: 0.0.40
codegen_flags: <defaults>
</compile_context>

<pallas_src>
import functools

import jax
import jax.numpy as jnp
from jax.experimental import pallas as pl
from jax.experimental.pallas import tpu as pltpu

_LANE = 128
_SUBLANE = 8


def _channel_attention_kernel(x_ref, w1t_ref, b1_ref, w2t_ref, b2_ref,
                              o_ref, sum_acc, max_acc, *,
                              hw_total, thw, mask_tail):
    """Grid = (batch tiles [parallel], spatial tiles [arbitrary reduction]).

    x_ref  : (tb, C, thw)  input tile, native dtype, spatial dim on lanes
    w1t_ref: (C, Cr)       first Linear weight, pre-transposed
    b1_ref : (1, Cr)
    w2t_ref: (Cr, C)       second Linear weight, pre-transposed
    b2_ref : (1, C)
    o_ref  : (tb, C)       sigmoid channel-attention scale (the only output)
    sum_acc, max_acc : (tb, C) f32 VMEM scratch (running sum / running max)
    """
    k = pl.program_id(1)
    nk = pl.num_programs(1)

    @pl.when(k == 0)
    def _init():
        sum_acc[...] = jnp.zeros_like(sum_acc)
        max_acc[...] = jnp.full_like(max_acc, -jnp.inf)

    x = x_ref[...]  # keep native dtype; no full-tile f32 materialization

    if mask_tail:
        # The last spatial block extends past HW (cdiv grid).  Mask the padded
        # lanes: 0 for the sum, -inf for the max.  For non-tail blocks
        # rem >= thw so the mask is all-true.
        rem = hw_total - k * thw
        lane = jax.lax.broadcasted_iota(jnp.int32, (1, 1, thw), 2)
        valid = lane < rem
        x_sum = jnp.where(valid, x, jnp.zeros((), x.dtype))
        x_max = jnp.where(valid, x, jnp.full((), -jnp.inf, x.dtype))
    else:
        x_sum = x
        x_max = x

    sum_acc[...] += jnp.sum(x_sum, axis=-1, dtype=jnp.float32)
    max_acc[...] = jnp.maximum(max_acc[...],
                               jnp.max(x_max, axis=-1).astype(jnp.float32))

    @pl.when(k == nk - 1)
    def _finalize():
        tb = o_ref.shape[0]
        avg_pool = sum_acc[...] * (1.0 / float(hw_total))      # (tb, C)
        max_pool = max_acc[...]                                 # (tb, C)
        # Shared MLP applied once on stacked [avg; max] rows.
        pooled = jnp.concatenate([avg_pool, max_pool], axis=0)  # (2*tb, C)
        h = jnp.dot(pooled, w1t_ref[...], preferred_element_type=jnp.float32)
        h = jnp.maximum(h + b1_ref[...], 0.0)                   # ReLU
        att = jnp.dot(h, w2t_ref[...], preferred_element_type=jnp.float32)
        att = att + b2_ref[...]
        att = att[:tb] + att[tb:]                                # (tb, C)
        o_ref[...] = jax.nn.sigmoid(att).astype(o_ref.dtype)


def _vmem_capacity_bytes():
    try:
        return int(pltpu.get_tpu_info().vmem_capacity_bytes)
    except Exception:  # pragma: no cover - conservative default (v7x-class)
        return 64 * 1024 * 1024


def _round_down(x, m):
    return (x // m) * m


def _choose_tiles(B, C, HW, itemsize, x_block_budget):
    """Pick (tb, thw).

    tb : multiple of 8 dividing B (or full B), preferring >= 2 batch blocks so
         the "parallel" axis actually shards across v7x's two TensorCores.
    thw: multiple of 128 (or full HW for tiny spatial extents); non-divisor
         tails are handled with a cdiv grid + in-kernel masking, so the tile
         width is driven by the byte budget, not by divisibility.
    """
    # --- batch tile candidates ---
    if B % _SUBLANE != 0:
        tb_cands = [B]                                  # full-dim layout escape
    else:
        tb_cands = [t for t in range(_SUBLANE, B + 1, _SUBLANE) if B % t == 0]
        if B >= 2 * _SUBLANE:
            mega = [t for t in tb_cands if B // t >= 2]  # keep >=2 parallel blocks
            if mega:
                tb_cands = mega
    tb = tb_cands[0]

    # --- spatial (lane) tile ---
    if HW < _LANE:
        thw_max = HW                                     # full-dim escape
    else:
        thw_max = _round_down(HW, _LANE)
    if thw_max <= _LANE:
        thw = thw_max
    else:
        fit = _round_down(x_block_budget // max(1, tb * C * itemsize), _LANE)
        thw = max(_LANE, min(thw_max, fit))

    # --- small spatial extent: spend leftover budget on a bigger batch tile ---
    if thw >= HW:
        for t in tb_cands:
            if t * C * thw * itemsize <= x_block_budget:
                tb = max(tb, t)

    return tb, thw


def channel_attention(x, w1, b1, w2, b2, *, b_tile=None, hw_tile=None):
    """x: [B, C, H, W] (NCHW, like PyTorch). Returns sigmoid scale expanded to x.shape."""
    B, C, H, W = x.shape
    HW = H * W
    Cr = w1.shape[0]
    itemsize = x.dtype.itemsize

    # Generation-aware budgets.
    vmem_cap = _vmem_capacity_bytes()
    if vmem_cap <= 64 * 2**20:          # v7x-class: 64 MiB VMEM per TensorCore
        base_limit = 48 * 2**20
        x_budget = 6 * 2**20
    else:                               # v5e / v6e: 128 MiB VMEM
        base_limit = 96 * 2**20
        x_budget = 8 * 2**20

    tb, thw = _choose_tiles(B, C, HW, itemsize, x_budget)
    if b_tile is not None:
        tb = b_tile
    if hw_tile is not None:
        thw = hw_tile
    assert B % tb == 0, "batch tile must divide B"
    assert thw == HW or thw % _LANE == 0, "spatial tile must be 128-aligned or full HW"

    mask_tail = (HW % thw) != 0

    x3 = x.reshape(B, C, HW)
    w1t = w1.T                  # (C, Cr)
    w2t = w2.T                  # (Cr, C)
    b1r = b1.reshape(1, Cr)
    b2r = b2.reshape(1, C)

    grid = (B // tb, pl.cdiv(HW, thw))

    # Honest VMEM estimate: double-buffered x block + (double-buffered) weights
    # + resident output block + f32 accumulators + slack.
    w_bytes = (w1t.size + b1r.size + w2t.size + b2r.size) * w1t.dtype.itemsize
    needed = (2 * tb * C * thw * itemsize
              + 2 * w_bytes
              + 2 * tb * C * itemsize
              + 2 * tb * C * 4
              + 2 * 2**20)
    vmem_limit = int(min(max(base_limit, needed), 0.9 * vmem_cap))

    cost = pl.CostEstimate(
        flops=2 * B * C * HW + 8 * B * C * Cr,
        transcendentals=B * C,
        bytes_accessed=x3.size * itemsize + B * C * itemsize + w_bytes,
    )

    scale = pl.pallas_call(
        functools.partial(_channel_attention_kernel,
                          hw_total=HW, thw=thw, mask_tail=mask_tail),
        out_shape=jax.ShapeDtypeStruct((B, C), x.dtype),
        grid=grid,
        in_specs=[
            pl.BlockSpec((tb, C, thw), lambda b, k: (b, 0, k)),
            pl.BlockSpec((C, Cr), lambda b, k: (0, 0)),
            pl.BlockSpec((1, Cr), lambda b, k: (0, 0)),
            pl.BlockSpec((Cr, C), lambda b, k: (0, 0)),
            pl.BlockSpec((1, C), lambda b, k: (0, 0)),
        ],
        out_specs=pl.BlockSpec((tb, C), lambda b, k: (b, 0)),
        scratch_shapes=[
            pltpu.VMEM((tb, C), jnp.float32),   # running sum
            pltpu.VMEM((tb, C), jnp.float32),   # running max
        ],
        compiler_params=pltpu.CompilerParams(
            dimension_semantics=("parallel", "arbitrary"),
            vmem_limit_bytes=vmem_limit,
        ),
        cost_estimate=cost,
    )(x3, w1t, b1r, w2t, b2r)

    # Broadcast outside the kernel so XLA can fuse it lazily into the consumer
    # instead of writing B*C*H*W redundant bytes to HBM.
    return jnp.broadcast_to(scale[:, :, None, None], (B, C, H, W))


def reference(x, w1, b1, w2, b2):
    """Pure-JAX reference mirroring the PyTorch forward."""
    B, C, H, W = x.shape
    avg_pool = jnp.mean(x, axis=(2, 3))   # (B, C)
    max_pool = jnp.max(x, axis=(2, 3))    # (B, C)

    def mlp(v):
        h = jnp.maximum(v @ w1.T + b1, 0.0)
        return h @ w2.T + b2

    att = mlp(avg_pool) + mlp(max_pool)
    scale = jax.nn.sigmoid(att)
    return jnp.broadcast_to(scale[:, :, None, None], (B, C, H, W))


if __name__ == "__main__":
    key = jax.random.PRNGKey(0)

    def make_params(key, C, reduction_ratio):
        Cr = C // reduction_ratio
        k1, k2, k3, k4 = jax.random.split(key, 4)
        bound1 = 1.0 / jnp.sqrt(jnp.float32(C))
        bound2 = 1.0 / jnp.sqrt(jnp.float32(Cr))
        w1 = jax.random.uniform(k1, (Cr, C), jnp.float32, -bound1, bound1)
        b1 = jax.random.uniform(k2, (Cr,), jnp.float32, -bound1, bound1)
        w2 = jax.random.uniform(k3, (C, Cr), jnp.float32, -bound2, bound2)
        b2 = jax.random.uniform(k4, (C,), jnp.float32, -bound2, bound2)
        return w1, b1, w2, b2

    # Case 1: small shape, auto tiling (single spatial block, single batch block).
    B, C, H, W = 2, 32, 16, 16
    kx, kp = jax.random.split(key)
    x = jax.random.normal(kx, (B, C, H, W), dtype=jnp.float32)
    w1, b1, w2, b2 = make_params(kp, C, 16)
    out = jax.block_until_ready(channel_attention(x, w1, b1, w2, b2))
    ref = reference(x, w1, b1, w2, b2)
    assert out.shape == (B, C, H, W)
    assert jnp.allclose(out, ref, atol=1e-5, rtol=1e-5), "case 1 mismatch"

    # Case 2: forces multi-step spatial reduction and multiple (parallel) batch
    # tiles, exercising the pl.when init/finalize accumulator path.
    B2, C2, H2, W2 = 16, 32, 16, 16
    kx2, kp2 = jax.random.split(kp)
    x2 = jax.random.normal(kx2, (B2, C2, H2, W2), dtype=jnp.float32)
    w1b, b1b, w2b, b2b = make_params(kp2, C2, 16)
    out2 = jax.block_until_ready(
        channel_attention(x2, w1b, b1b, w2b, b2b, b_tile=8, hw_tile=128))
    ref2 = reference(x2, w1b, b1b, w2b, b2b)
    assert jnp.allclose(out2, ref2, atol=1e-5, rtol=1e-5), "case 2 mismatch"

    # Case 3: non-128-aligned spatial extent (H*W = 324) -> cdiv grid with
    # in-kernel tail masking of the padded lanes.
    B3, C3, H3, W3 = 2, 32, 18, 18
    kx3, kp3 = jax.random.split(kp2)
    x3 = jax.random.normal(kx3, (B3, C3, H3, W3), dtype=jnp.float32)
    w1c, b1c, w2c, b2c = make_params(kp3, C3, 16)
    out3 = jax.block_until_ready(channel_attention(x3, w1c, b1c, w2c, b2c))
    ref3 = reference(x3, w1c, b1c, w2c, b2c)
    assert jnp.allclose(out3, ref3, atol=1e-5, rtol=1e-5), "case 3 mismatch"

    print("KERNEL_OK")
</pallas_src>

<mosaic_0001>
module attributes {stable_mosaic.version = 11 : i64} {
  func.func @_channel_attention_kernel(%arg0: i32, %arg1: i32, %arg2: memref<2x32x256xf32, #tpu.memory_space<vmem>>, %arg3: memref<32x2xf32, #tpu.memory_space<vmem>>, %arg4: memref<1x2xf32, #tpu.memory_space<vmem>>, %arg5: memref<2x32xf32, #tpu.memory_space<vmem>>, %arg6: memref<1x32xf32, #tpu.memory_space<vmem>>, %arg7: memref<2x32xf32, #tpu.memory_space<vmem>>, %arg8: memref<2x32xf32, #tpu.memory_space<vmem>>, %arg9: memref<2x32xf32, #tpu.memory_space<vmem>>) attributes {dimension_semantics = [#tpu.dimension_semantics<parallel>, #tpu.dimension_semantics<arbitrary>], iteration_bounds = array<i64: 1, 1>, scalar_prefetch = 0 : i64, scratch_operands = 2 : i64, tpu.core_type = #tpu.core_type<tc>, window_params = [{transform_indices = @transform_0, window_bounds = array<i64: 2, 32, 256>}, {pipeline_mode = #tpu.pipeline_mode<synchronous>, transform_indices = @transform_1, window_bounds = array<i64: 32, 2>}, {pipeline_mode = #tpu.pipeline_mode<synchronous>, transform_indices = @transform_2, window_bounds = array<i64: 1, 2>}, {pipeline_mode = #tpu.pipeline_mode<synchronous>, transform_indices = @transform_3, window_bounds = array<i64: 2, 32>}, {pipeline_mode = #tpu.pipeline_mode<synchronous>, transform_indices = @transform_4, window_bounds = array<i64: 1, 32>}, {transform_indices = @transform_5, window_bounds = array<i64: 2, 32>}]} {
    %c0_i32 = arith.constant 0 : i32
    %0 = arith.cmpi eq, %arg1, %c0_i32 : i32
    %1 = arith.extui %0 : i1 to i32
    %c0_i32_0 = arith.constant 0 : i32
    %2 = arith.cmpi ne, %1, %c0_i32_0 : i32
    scf.if %2 {
      %cst_14 = arith.constant 0.000000e+00 : f32
      %15 = vector.broadcast %cst_14 : f32 to vector<2x32xf32>
      %c0_15 = arith.constant 0 : index
      %c0_16 = arith.constant 0 : index
      %16 = vector.load %arg8[%c0_15, %c0_16] : memref<2x32xf32, #tpu.memory_space<vmem>>, vector<2x32xf32>
      tpu.vector_store %arg8[%c0_15, %c0_16], %15 {strides = array<i32>} : memref<2x32xf32, #tpu.memory_space<vmem>>, vector<2x32xf32>,
      %cst_17 = arith.constant 0xFF800000 : f32
      %17 = vector.broadcast %cst_17 : f32 to vector<2x32xf32>
      %c0_18 = arith.constant 0 : index
      %c0_19 = arith.constant 0 : index
      %18 = vector.load %arg9[%c0_18, %c0_19] : memref<2x32xf32, #tpu.memory_space<vmem>>, vector<2x32xf32>
      tpu.vector_store %arg9[%c0_18, %c0_19], %17 {strides = array<i32>} : memref<2x32xf32, #tpu.memory_space<vmem>>, vector<2x32xf32>,
    } else {
    }
    %c0 = arith.constant 0 : index
    %c0_1 = arith.constant 0 : index
    %c0_2 = arith.constant 0 : index
    %3 = vector.load %arg2[%c0, %c0_1, %c0_2] : memref<2x32x256xf32, #tpu.memory_space<vmem>>, vector<2x32x256xf32>
    %c0_3 = arith.constant 0 : index
    %c0_4 = arith.constant 0 : index
    %4 = vector.load %arg8[%c0_3, %c0_4] : memref<2x32xf32, #tpu.memory_space<vmem>>, vector<2x32xf32>
    %cst = arith.constant dense<0.000000e+00> : vector<2x32xf32>
    %5 = vector.multi_reduction <add>, %3, %cst [2] : vector<2x32x256xf32> to vector<2x32xf32>
    %6 = arith.addf %4, %5 : vector<2x32xf32>
    %c0_5 = arith.constant 0 : index
    %c0_6 = arith.constant 0 : index
    %7 = vector.load %arg8[%c0_5, %c0_6] : memref<2x32xf32, #tpu.memory_space<vmem>>, vector<2x32xf32>
    tpu.vector_store %arg8[%c0_5, %c0_6], %6 {strides = array<i32>} : memref<2x32xf32, #tpu.memory_space<vmem>>, vector<2x32xf32>,
    %c0_7 = arith.constant 0 : index
    %c0_8 = arith.constant 0 : index
    %8 = vector.load %arg9[%c0_7, %c0_8] : memref<2x32xf32, #tpu.memory_space<vmem>>, vector<2x32xf32>
    %cst_9 = arith.constant dense<0xFF800000> : vector<2x32xf32>
    %9 = vector.multi_reduction <maximumf>, %3, %cst_9 [2] : vector<2x32x256xf32> to vector<2x32xf32>
    %10 = arith.maximumf %8, %9 : vector<2x32xf32>
    %c0_10 = arith.constant 0 : index
    %c0_11 = arith.constant 0 : index
    %11 = vector.load %arg9[%c0_10, %c0_11] : memref<2x32xf32, #tpu.memory_space<vmem>>, vector<2x32xf32>
    tpu.vector_store %arg9[%c0_10, %c0_11], %10 {strides = array<i32>} : memref<2x32xf32, #tpu.memory_space<vmem>>, vector<2x32xf32>,
    %c0_i32_12 = arith.constant 0 : i32
    %12 = arith.cmpi eq, %arg1, %c0_i32_12 : i32
    %13 = arith.extui %12 : i1 to i32
    %c0_i32_13 = arith.constant 0 : i32
    %14 = arith.cmpi ne, %13, %c0_i32_13 : i32
    scf.if %14 {
      %c0_14 = arith.constant 0 : index
      %c0_15 = arith.constant 0 : index
      %15 = vector.load %arg8[%c0_14, %c0_15] : memref<2x32xf32, #tpu.memory_space<vmem>>, vector<2x32xf32>
      %cst_16 = arith.constant 3.906250e-03 : f32
      %16 = vector.broadcast %cst_16 : f32 to vector<2x32xf32>
      %17 = arith.mulf %15, %16 : vector<2x32xf32>
      %c0_17 = arith.constant 0 : index
      %c0_18 = arith.constant 0 : index
      %18 = vector.load %arg9[%c0_17, %c0_18] : memref<2x32xf32, #tpu.memory_space<vmem>>, vector<2x32xf32>
      %19 = tpu.concatenate %17, %18 in 0 : vector<2x32xf32>, vector<2x32xf32> -> vector<4x32xf32>
      %c0_19 = arith.constant 0 : index
      %c0_20 = arith.constant 0 : index
      %20 = vector.load %arg3[%c0_19, %c0_20] : memref<32x2xf32, #tpu.memory_space<vmem>>, vector<32x2xf32>
      %cst_21 = arith.constant dense<0.000000e+00> : vector<4x2xf32>
      %21 = tpu.matmul %19, %20, %cst_21 {dimension_numbers = #tpu.dot_dimension_numbers<[1], [0], [0], [1], [0, 0, 1, 1], [], []>} : vector<4x32xf32>, vector<32x2xf32>, vector<4x2xf32> -> vector<4x2xf32>
      %c0_22 = arith.constant 0 : index
      %c0_23 = arith.constant 0 : index
      %22 = vector.load %arg4[%c0_22, %c0_23] : memref<1x2xf32, #tpu.memory_space<vmem>>, vector<1x2xf32>
      %23 = vector.broadcast %22 : vector<1x2xf32> to vector<4x2xf32>
      %24 = arith.addf %21, %23 : vector<4x2xf32>
      %cst_24 = arith.constant 0.000000e+00 : f32
      %25 = vector.broadcast %cst_24 : f32 to vector<4x2xf32>
      %26 = arith.maximumf %24, %25 : vector<4x2xf32>
      %c0_25 = arith.constant 0 : index
      %c0_26 = arith.constant 0 : index
      %27 = vector.load %arg5[%c0_25, %c0_26] : memref<2x32xf32, #tpu.memory_space<vmem>>, vector<2x32xf32>
      %cst_27 = arith.constant dense<0.000000e+00> : vector<4x32xf32>
      %28 = tpu.matmul %26, %27, %cst_27 {dimension_numbers = #tpu.dot_dimension_numbers<[1], [0], [0], [1], [0, 0, 1, 1], [], []>} : vector<4x2xf32>, vector<2x32xf32>, vector<4x32xf32> -> vector<4x32xf32>
      %c0_28 = arith.constant 0 : index
      %c0_29 = arith.constant 0 : index
      %29 = vector.load %arg6[%c0_28, %c0_29] : memref<1x32xf32, #tpu.memory_space<vmem>>, vector<1x32xf32>
      %30 = vector.broadcast %29 : vector<1x32xf32> to vector<4x32xf32>
      %31 = arith.addf %28, %30 : vector<4x32xf32>
      %32 = vector.extract_strided_slice %31 {offsets = [0, 0], sizes = [2, 32], strides = [1, 1]} : vector<4x32xf32> to vector<2x32xf32>
      %33 = vector.extract_strided_slice %31 {offsets = [2, 0], sizes = [2, 32], strides = [1, 1]} : vector<4x32xf32> to vector<2x32xf32>
      %34 = arith.addf %32, %33 : vector<2x32xf32>
      %35 = arith.negf %34 : vector<2x32xf32>
      %36 = math.exp %35 : vector<2x32xf32>
      %cst_30 = arith.constant 1.000000e+00 : f32
      %37 = vector.broadcast %cst_30 : f32 to vector<2x32xf32>
      %38 = arith.addf %37, %36 : vector<2x32xf32>
      %39 = arith.divf %37, %38 : vector<2x32xf32>
      %c0_31 = arith.constant 0 : index
      %c0_32 = arith.constant 0 : index
      %40 = vector.load %arg7[%c0_31, %c0_32] : memref<2x32xf32, #tpu.memory_space<vmem>>, vector<2x32xf32>
      tpu.vector_store %arg7[%c0_31, %c0_32], %39 {strides = array<i32>} : memref<2x32xf32, #tpu.memory_space<vmem>>, vector<2x32xf32>,
    } else {
    }
    return
  }
  func.func @transform_0(%arg0: i32, %arg1: i32) -> (i32, i32, i32) {
    %c0_i32 = arith.constant 0 : i32
    %c0_i32_0 = arith.constant 0 : i32
    return %arg0, %c0_i32, %arg1 : i32, i32, i32
  }
  func.func @transform_1(%arg0: i32, %arg1: i32) -> (i32, i32) {
    %c0_i32 = arith.constant 0 : i32
    %c0_i32_0 = arith.constant 0 : i32
    %c0_i32_1 = arith.constant 0 : i32
    return %c0_i32, %c0_i32_0 : i32, i32
  }
  func.func @transform_2(%arg0: i32, %arg1: i32) -> (i32, i32) {
    %c0_i32 = arith.constant 0 : i32
    %c0_i32_0 = arith.constant 0 : i32
    %c0_i32_1 = arith.constant 0 : i32
    return %c0_i32, %c0_i32_0 : i32, i32
  }
  func.func @transform_3(%arg0: i32, %arg1: i32) -> (i32, i32) {
    %c0_i32 = arith.constant 0 : i32
    %c0_i32_0 = arith.constant 0 : i32
    %c0_i32_1 = arith.constant 0 : i32
    return %c0_i32, %c0_i32_0 : i32, i32
  }
  func.func @transform_4(%arg0: i32, %arg1: i32) -> (i32, i32) {
    %c0_i32 = arith.constant 0 : i32
    %c0_i32_0 = arith.constant 0 : i32
    %c0_i32_1 = arith.constant 0 : i32
    return %c0_i32, %c0_i32_0 : i32, i32
  }
  func.func @transform_5(%arg0: i32, %arg1: i32) -> (i32, i32) {
    %c0_i32 = arith.constant 0 : i32
    %c0_i32_0 = arith.constant 0 : i32
    return %arg0, %c0_i32 : i32, i32
  }
}

</mosaic_0001>

<llo_original>
// kernel: tpu_custom_call.1
$region0: #{tpu_custom_call.1}
  #allocation0 [shape = 'u32[]', space=smem, size = 0x4, offset = 0x4, fixed_abs, tag = 'smem constant byte address 0x4 - core index']
  #allocation1 [shape = 'u32[144,128]{1,0:T(1,128)}', space=vmem, size = 0x12000, scoped, tag = 'internal scratch']
  #allocation2 [shape = 'f32[2,32]{1,0:T(2,128)}', space=vmem, size = 0x400, scoped, tag = 'scratch operand']
  #allocation3 [shape = 'f32[2,32]{1,0:T(2,128)}', space=vmem, size = 0x400, scoped, tag = 'scratch operand']
  %s0 = inlined_call_operand.hbm [shape: f32[2,32,256], index: 0, kind: input, shape index: {}]
  %s1 = inlined_call_operand.vmem [shape: f32[32,2], index: 1, kind: input, shape index: {}]
  %s2 = inlined_call_operand.vmem [shape: f32[1,2], index: 2, kind: input, shape index: {}]
  %s3 = inlined_call_operand.vmem [shape: f32[2,32], index: 3, kind: input, shape index: {}]
  %s4 = inlined_call_operand.vmem [shape: f32[1,32], index: 4, kind: input, shape index: {}]
  %s5 = inlined_call_operand.hbm [shape: f32[2,32], index: 5, kind: output, shape index: {}]
  %s6 = sld [smem:[#allocation0]]
  $region42: #{tpu_custom_call.1} parent=0
    _
  %s8 = ssub.s32 1, %s6
  %s9 = scalar_select 0, %s8, %s6
  $region1: #{tpu_custom_call.1} parent=0
    #allocation4 [shape = 'u8[65536]{0}', space=vmem, size = 0x10000, scoped, tag = 'input window, operand 0, single buffered']
    #allocation5 [shape = 's32[1]{0}', space=sflag, size = 0x4, scoped, tag = 'scoped memory for tpu_custom_call.1']
    #allocation6 [shape = 's32[1]{0}', space=sflag, size = 0x4, scoped, tag = 'scoped memory for tpu_custom_call.1']
    #allocation7 [shape = 'u8[1024]{0}', space=vmem, size = 0x400, scoped, tag = 'output window, operand 0, single buffered']
    %10 = vsyncpa [#allocation5], 0
    %11 = vsyncpa [#allocation6], 0
    // Predicated region
    $region2: #{tpu_custom_call.1} parent=1 // pred_check
      _
    $region3: #{tpu_custom_call.1} parent=1 // pred_check_branch
      %13 = sbr.rel (0) target = $region5
    $region4: #{tpu_custom_call.1} parent=1 // pred_region
      %s15 = ssub.s32 2048, 2048
      %16 = vsyncadd [#allocation5], %s15
      %s17 = sshll.u32 [#allocation4], 4
      %s18 = int_to_ptr.vmem [resolvable:$true] %s17
      %23 = dma.hbm_to_vmem [thread:$0]  %s0, 2048, %s18, [#allocation5], 256, 256, 16
    $region5: #{tpu_custom_call.1} parent=1 // pred_fallthru
      _
    // Predicated region
    $region6: #{tpu_custom_call.1} parent=1 // pred_check
      _
    $region7: #{tpu_custom_call.1} parent=1 // pred_check_branch
      %25 = sbr.rel (0) target = $region9
    $region8: #{tpu_custom_call.1} parent=1 // pred_region
      _
    $region9: #{tpu_custom_call.1} parent=1 // pred_fallthru
      _
    // Predicated region
    $region10: #{tpu_custom_call.1} parent=1 // pred_check
      _
    $region11: #{tpu_custom_call.1} parent=1 // pred_check_branch
      %27 = sbr.rel (0) target = $region13
    $region12: #{tpu_custom_call.1} parent=1 // pred_region
      _
    $region13: #{tpu_custom_call.1} parent=1 // pred_fallthru
      _
    // Predicated region
    $region14: #{tpu_custom_call.1} parent=1 // pred_check
      _
    $region15: #{tpu_custom_call.1} parent=1 // pred_check_branch
      %29 = sbr.rel (0) target = $region17
    $region16: #{tpu_custom_call.1} parent=1 // pred_region
      _
    $region17: #{tpu_custom_call.1} parent=1 // pred_fallthru
      _
    // Predicated region
    $region18: #{tpu_custom_call.1} parent=1 // pred_check
      _
    $region19: #{tpu_custom_call.1} parent=1 // pred_check_branch
      %31 = sbr.rel (0) target = $region21
    $region20: #{tpu_custom_call.1} parent=1 // pred_region
      _
    $region21: #{tpu_custom_call.1} parent=1 // pred_fallthru
      _
    // Predicated region
    $region22: #{tpu_custom_call.1} parent=1 // pred_check
      _
    $region23: #{tpu_custom_call.1} parent=1 // pred_check_branch
      %33 = sbr.rel (0) target = $region25
    $region24: #{tpu_custom_call.1} parent=1 // pred_region
      %34 = dma.done [#allocation5], 2048
    $region25: #{tpu_custom_call.1} parent=1 // pred_fallthru
      _
    %p35 = scmp.eq.s32.totalorder 0, 0
    // Predicated region
    $region26: #{tpu_custom_call.1} parent=1 // pred_check
      %p36 = pneg %p35
    $region27: #{tpu_custom_call.1} parent=1 // pred_check_branch
      %38 = sbr.rel (%p36) target = $region29
    $region28: #{tpu_custom_call.1} parent=1 // pred_region
      %vm39 = vcmask 254976
      %40 = vst.msk [vmem:[#allocation2] sm:$0x3] %vm39, 0.0
      %41 = vst.msk [vmem:[#allocation3] sm:$0x3] %vm39, -inf
    $region29: #{tpu_custom_call.1} parent=1 // pred_fallthru
      _
    %v42 = vld [vmem:[#allocation4] sm:$0xff]
    %v43 = vld [vmem:[#allocation4 + $0x8] sm:$0xff]
    %v44 = vld [vmem:[#allocation4 + $0x10] sm:$0xff]
    %v45 = vld [vmem:[#allocation4 + $0x18] sm:$0xff]
    %v46 = vld [vmem:[#allocation4 + $0x20] sm:$0xff]
    %v47 = vld [vmem:[#allocation4 + $0x28] sm:$0xff]
    %v48 = vld [vmem:[#allocation4 + $0x30] sm:$0xff]
    %v49 = vld [vmem:[#allocation4 + $0x38] sm:$0xff]
    %v50 = vld [vmem:[#allocation4 + $0x40] sm:$0xff]
    %v51 = vld [vmem:[#allocation4 + $0x48] sm:$0xff]
    %v52 = vld [vmem:[#allocation4 + $0x50] sm:$0xff]
    %v53 = vld [vmem:[#allocation4 + $0x58] sm:$0xff]
    %v54 = vld [vmem:[#allocation4 + $0x60] sm:$0xff]
    %v55 = vld [vmem:[#allocation4 + $0x68] sm:$0xff]
    %v56 = vld [vmem:[#allocation4 + $0x70] sm:$0xff]
    %v57 = vld [vmem:[#allocation4 + $0x78] sm:$0xff]
    %v58 = vld [vmem:[#allocation2] sm:$0x3]
    %v59 = vadd.f32 %v42, %v43
    %60 = vadd.xlane.f32.xlu0 %v59
    %v61 = vpop.xlane.xlu0 %60
    %v62 = vadd.f32 %v44, %v45
    %63 = vadd.xlane.f32.xlu0 %v62
    %v64 = vpop.xlane.xlu0 %63
    %v65 = vadd.f32 %v46, %v47
    %66 = vadd.xlane.f32.xlu0 %v65
    %v67 = vpop.xlane.xlu0 %66
    %v68 = vadd.f32 %v48, %v49
    %69 = vadd.xlane.f32.xlu0 %v68
    %v70 = vpop.xlane.xlu0 %69
    %v71 = vadd.f32 %v50, %v51
    %72 = vadd.xlane.f32.xlu0 %v71
    %v73 = vpop.xlane.xlu0 %72
    %v74 = vadd.f32 %v52, %v53
    %75 = vadd.xlane.f32.xlu0 %v74
    %v76 = vpop.xlane.xlu0 %75
    %v77 = vadd.f32 %v54, %v55
    %78 = vadd.xlane.f32.xlu0 %v77
    %v79 = vpop.xlane.xlu0 %78
    %v80 = vadd.f32 %v56, %v57
    %81 = vadd.xlane.f32.xlu0 %v80
    %v82 = vpop.xlane.xlu0 %81
    %v91 = vlaneseq
    %v92 = vand.u32 %v91, 127
    %v93 = vlaneseq
    %v94 = vshrl.u32 %v93, 7
    %v95 = vsub.s32 %v92, %v94
    %v96 = vrot.slane %v61, %v95
    %v97 = vadd.s32 %v92, 4294967288
    %v98 = vlaneseq
    %v99 = vshrl.u32 %v98, 7
    %v100 = vsub.s32 %v97, %v99
    %v101 = vrot.slane %v64, %v100
    %vm102 = vcmask 130112
    %v103 = vsel %vm102, %v101, %v96
    %v104 = vadd.s32 %v92, 4294967280
    %v105 = vlaneseq
    %v106 = vshrl.u32 %v105, 7
    %v107 = vsub.s32 %v104, %v106
    %v108 = vrot.slane %v67, %v107
    %vm109 = vcmask 195712
    %v110 = vsel %vm109, %v108, %v103
    %v111 = vadd.s32 %v92, 4294967272
    %v112 = vlaneseq
    %v113 = vshrl.u32 %v112, 7
    %v114 = vsub.s32 %v111, %v113
    %v115 = vrot.slane %v70, %v114
    %vm116 = vcmask 261312
    %v117 = vsel %vm116, %v115, %v110
    %v118 = vlaneseq
    %v119 = vshrl.u32 %v118, 7
    %v120 = vsub.s32 %v92, %v119
    %v121 = vrot.slane %v73, %v120
    %v122 = vlaneseq
    %v123 = vshrl.u32 %v122, 7
    %v124 = vsub.s32 %v97, %v123
    %v125 = vrot.slane %v76, %v124
    %v126 = vsel %vm102, %v125, %v121
    %v127 = vlaneseq
    %v128 = vshrl.u32 %v127, 7
    %v129 = vsub.s32 %v104, %v128
    %v130 = vrot.slane %v79, %v129
    %v131 = vsel %vm109, %v130, %v126
    %v132 = vlaneseq
    %v133 = vshrl.u32 %v132, 7
    %v134 = vsub.s32 %v111, %v133
    %v135 = vrot.slane %v82, %v134
    %v136 = vsel %vm116, %v135, %v131
    %vm137 = vcmask 1041409
    %v138 = vsel %vm137, %v136, %v117
    %v140 = vadd.f32 %v58, %v138
    %vm141 = vcmask 254976
    %142 = vst.msk [vmem:[#allocation2] sm:$0x3] %vm141, %v140
    %v143 = vld [vmem:[#allocation3] sm:$0x3]
    %v144 = vmax.f32 %v42, %v43
    %145 = vmax.xlane.f32.xlu0 %v144
    %v146 = vpop.xlane.xlu0 %145
    %v147 = vmax.f32 %v44, %v45
    %148 = vmax.xlane.f32.xlu0 %v147
    %v149 = vpop.xlane.xlu0 %148
    %v150 = vmax.f32 %v46, %v47
    %151 = vmax.xlane.f32.xlu0 %v150
    %v152 = vpop.xlane.xlu0 %151
    %v153 = vmax.f32 %v48, %v49
    %154 = vmax.xlane.f32.xlu0 %v153
    %v155 = vpop.xlane.xlu0 %154
    %v156 = vmax.f32 %v50, %v51
    %157 = vmax.xlane.f32.xlu0 %v156
    %v158 = vpop.xlane.xlu0 %157
    %v159 = vmax.f32 %v52, %v53
    %160 = vmax.xlane.f32.xlu0 %v159
    %v161 = vpop.xlane.xlu0 %160
    %v162 = vmax.f32 %v54, %v55
    %163 = vmax.xlane.f32.xlu0 %v162
    %v164 = vpop.xlane.xlu0 %163
    %v165 = vmax.f32 %v56, %v57
    %166 = vmax.xlane.f32.xlu0 %v165
    %v167 = vpop.xlane.xlu0 %166
    %v176 = vlaneseq
    %v177 = vshrl.u32 %v176, 7
    %v178 = vsub.s32 %v92, %v177
    %v179 = vrot.slane %v146, %v178
    %v180 = vlaneseq
    %v181 = vshrl.u32 %v180, 7
    %v182 = vsub.s32 %v97, %v181
    %v183 = vrot.slane %v149, %v182
    %v184 = vsel %vm102, %v183, %v179
    %v185 = vlaneseq
    %v186 = vshrl.u32 %v185, 7
    %v187 = vsub.s32 %v104, %v186
    %v188 = vrot.slane %v152, %v187
    %v189 = vsel %vm109, %v188, %v184
    %v190 = vlaneseq
    %v191 = vshrl.u32 %v190, 7
    %v192 = vsub.s32 %v111, %v191
    %v193 = vrot.slane %v155, %v192
    %v194 = vsel %vm116, %v193, %v189
    %v195 = vlaneseq
    %v196 = vshrl.u32 %v195, 7
    %v197 = vsub.s32 %v92, %v196
    %v198 = vrot.slane %v158, %v197
    %v199 = vlaneseq
    %v200 = vshrl.u32 %v199, 7
    %v201 = vsub.s32 %v97, %v200
    %v202 = vrot.slane %v161, %v201
    %v203 = vsel %vm102, %v202, %v198
    %v204 = vlaneseq
    %v205 = vshrl.u32 %v204, 7
    %v206 = vsub.s32 %v104, %v205
    %v207 = vrot.slane %v164, %v206
    %v208 = vsel %vm109, %v207, %v203
    %v209 = vlaneseq
    %v210 = vshrl.u32 %v209, 7
    %v211 = vsub.s32 %v111, %v210
    %v212 = vrot.slane %v167, %v211
    %v213 = vsel %vm116, %v212, %v208
    %v214 = vsel %vm137, %v213, %v194
    %v216 = vmax.f32 %v143, %v214
    %217 = vst.msk [vmem:[#allocation3] sm:$0x3] %vm141, %v216
    // Predicated region
    $region30: #{tpu_custom_call.1} parent=1 // pred_check
      %p218 = pneg %p35
    $region31: #{tpu_custom_call.1} parent=1 // pred_check_branch
      %220 = sbr.rel (%p218) target = $region33
    $region32: #{tpu_custom_call.1} parent=1 // pred_region
      %v221 = vld [vmem:[#allocation2] sm:$0x3]
      %v222 = vmul.f32 %v221, 0.00390625
      %v223 = vld [vmem:[#allocation3] sm:$0x3]
      %v225 = vrot.slane %v223, 6
      %vm227 = vcmask 1041408
      %v228 = vsel %vm227, %v222, %v225
      %v229 = vld [vmem:[%s1] sm:$0xff]
      %v230 = vld [vmem:[%s1 + $0x8] sm:$0xff]
      %v231 = vld [vmem:[%s1 + $0x10] sm:$0xff]
      %v232 = vld [vmem:[%s1 + $0x18] sm:$0xff]
      %v233 = vld [vmem:[%s2] sm:$0x1]
      %v235 = vlaneseq
      %v236 = vshrl.u32 %v235, 7
      %v237 = vsub.s32 0, %v236
      %v238 = vrot.slane %v233, %v237
      %vm240 = vcmask 261120
      %v242 = vsel %vm240, %v228, 0
      %244 = vmatprep.subr.mxu0 0.0
      %245 = vmatpush1.msra.mxu0 0.0
      %246 = vmatprep.subr.mxu0 0.0
      %247 = vmatpush1.msra.mxu0 0.0
      %248 = vmatprep.subr.mxu0 0.0
      %249 = vmatpush1.msra.mxu0 0.0
      %250 = vmatprep.subr.mxu0 0.0
      %251 = vmatpush1.msra.mxu0 0.0
      %252 = vmatprep.subr.mxu0 0.0
      %253 = vmatpush1.msra.mxu0 0.0
      %254 = vmatprep.subr.mxu0 0.0
      %255 = vmatpush1.msra.mxu0 0.0
      %256 = vmatprep.subr.mxu0 0.0
      %257 = vmatpush1.msra.mxu0 0.0
      %258 = vmatprep.subr.mxu0 0.0
      %259 = vmatpush1.msra.mxu0 0.0
      %260 = vmatprep.subr.mxu0 0.0
      %261 = vmatpush1.msra.mxu0 0.0
      %262 = vmatprep.subr.mxu0 0.0
      %263 = vmatpush1.msra.mxu0 0.0
      %264 = vmatprep.subr.mxu0 0.0
      %265 = vmatpush1.msra.mxu0 0.0
      %266 = vmatprep.subr.mxu0 0.0
      %267 = vmatpush1.msra.mxu0 0.0
      %268 = vmatprep.subr.mxu0 0.0
      %269 = vmatpush1.msra.mxu0 %v232
      %270 = vmatprep.subr.mxu0 0.0
      %271 = vmatpush1.msra.mxu0 %v231
      %272 = vmatprep.subr.mxu0 0.0
      %273 = vmatpush1.msra.mxu0 %v230
      %274 = vmatprep.subr.mxu0 0.0
      %275 = vmatpush1.msra.mxu0 %v229
      %276 = vmatprep.subr.mxu0 0.0
      %277 = vmatpush2.msra.mxu0 0.0
      %278 = vmatprep.subr.mxu0 0.0
      %279 = vmatpush2.msra.mxu0 0.0
      %280 = vmatprep.subr.mxu0 0.0
      %281 = vmatpush2.msra.mxu0 0.0
      %282 = vmatprep.subr.mxu0 0.0
      %283 = vmatpush2.msra.mxu0 0.0
      %284 = vmatprep.subr.mxu0 0.0
      %285 = vmatpush2.msra.mxu0 0.0
      %286 = vmatprep.subr.mxu0 0.0
      %287 = vmatpush2.msra.mxu0 0.0
      %288 = vmatprep.subr.mxu0 0.0
      %289 = vmatpush2.msra.mxu0 0.0
      %290 = vmatprep.subr.mxu0 0.0
      %291 = vmatpush2.msra.mxu0 0.0
      %292 = vmatprep.subr.mxu0 0.0
      %293 = vmatpush2.msra.mxu0 0.0
      %294 = vmatprep.subr.mxu0 0.0
      %295 = vmatpush2.msra.mxu0 0.0
      %296 = vmatprep.subr.mxu0 0.0
      %297 = vmatpush2.msra.mxu0 0.0
      %298 = vmatprep.subr.mxu0 0.0
      %299 = vmatpush2.msra.mxu0 0.0
      %300 = vmatprep.subr.mxu0 0.0
      %301 = vmatpush2.msra.mxu0 0.0
      %302 = vmatprep.subr.mxu0 0.0
      %303 = vmatpush2.msra.mxu0 0.0
      %304 = vmatprep.subr.mxu0 0.0
      %305 = vmatpush2.msra.mxu0 0.0
      %306 = vmatprep.subr.mxu0 0.0
      %307 = vmatpush2.msra.mxu0 0.0
      %308 = vmatprep.mubr.f32.mxu0 0.0
      %309 = vmatmul.mubr.f32.gmra.mxu0 %v242
      %v310 = vpop.f32.mrf.mxu0
      %v311 = vadd.f32 %v238, %v310
      %v312 = vpop.f32.mrf.mxu0
      %313 = vdwg.mxu0
      %v314 = vmax.f32 %v311, 0.0
      %v315 = vld [vmem:[%s3] sm:$0x3]
      %v316 = vld [vmem:[%s4] sm:$0x1]
      %v318 = vlaneseq
      %v319 = vshrl.u32 %v318, 7
      %v320 = vsub.s32 0, %v319
      %v321 = vrot.slane %v316, %v320
      %vm323 = vcmask 15360
      %v325 = vsel %vm323, %v314, 0
      %v328 = vsel %vm227, %v315, 0
      %330 = vmatprep.subr.mxu0 0.0
      %331 = vmatpush1.msra.mxu0 0.0
      %332 = vmatprep.subr.mxu0 0.0
      %333 = vmatpush1.msra.mxu0 0.0
      %334 = vmatprep.subr.mxu0 0.0
      %335 = vmatpush1.msra.mxu0 0.0
      %336 = vmatprep.subr.mxu0 0.0
      %337 = vmatpush1.msra.mxu0 0.0
      %338 = vmatprep.subr.mxu0 0.0
      %339 = vmatpush1.msra.mxu0 0.0
      %340 = vmatprep.subr.mxu0 0.0
      %341 = vmatpush1.msra.mxu0 0.0
      %342 = vmatprep.subr.mxu0 0.0
      %343 = vmatpush1.msra.mxu0 0.0
      %344 = vmatprep.subr.mxu0 0.0
      %345 = vmatpush1.msra.mxu0 0.0
      %346 = vmatprep.subr.mxu0 0.0
      %347 = vmatpush1.msra.mxu0 0.0
      %348 = vmatprep.subr.mxu0 0.0
      %349 = vmatpush1.msra.mxu0 0.0
      %350 = vmatprep.subr.mxu0 0.0
      %351 = vmatpush1.msra.mxu0 0.0
      %352 = vmatprep.subr.mxu0 0.0
      %353 = vmatpush1.msra.mxu0 0.0
      %354 = vmatprep.subr.mxu0 0.0
      %355 = vmatpush1.msra.mxu0 0.0
      %356 = vmatprep.subr.mxu0 0.0
      %357 = vmatpush1.msra.mxu0 0.0
      %358 = vmatprep.subr.mxu0 0.0
      %359 = vmatpush1.msra.mxu0 0.0
      %360 = vmatprep.subr.mxu0 0.0
      %361 = vmatpush1.msra.mxu0 %v328
      %362 = vmatprep.subr.mxu0 0.0
      %363 = vmatpush2.msra.mxu0 0.0
      %364 = vmatprep.subr.mxu0 0.0
      %365 = vmatpush2.msra.mxu0 0.0
      %366 = vmatprep.subr.mxu0 0.0
      %367 = vmatpush2.msra.mxu0 0.0
      %368 = vmatprep.subr.mxu0 0.0
      %369 = vmatpush2.msra.mxu0 0.0
      %370 = vmatprep.subr.mxu0 0.0
      %371 = vmatpush2.msra.mxu0 0.0
      %372 = vmatprep.subr.mxu0 0.0
      %373 = vmatpush2.msra.mxu0 0.0
      %374 = vmatprep.subr.mxu0 0.0
      %375 = vmatpush2.msra.mxu0 0.0
      %376 = vmatprep.subr.mxu0 0.0
      %377 = vmatpush2.msra.mxu0 0.0
      %378 = vmatprep.subr.mxu0 0.0
      %379 = vmatpush2.msra.mxu0 0.0
      %380 = vmatprep.subr.mxu0 0.0
      %381 = vmatpush2.msra.mxu0 0.0
      %382 = vmatprep.subr.mxu0 0.0
      %383 = vmatpush2.msra.mxu0 0.0
      %384 = vmatprep.subr.mxu0 0.0
      %385 = vmatpush2.msra.mxu0 0.0
      %386 = vmatprep.subr.mxu0 0.0
      %387 = vmatpush2.msra.mxu0 0.0
      %388 = vmatprep.subr.mxu0 0.0
      %389 = vmatpush2.msra.mxu0 0.0
      %390 = vmatprep.subr.mxu0 0.0
      %391 = vmatpush2.msra.mxu0 0.0
      %392 = vmatprep.subr.mxu0 0.0
      %393 = vmatpush2.msra.mxu0 0.0
      %394 = vmatprep.mubr.f32.mxu0 0.0
      %395 = vmatmul.mubr.f32.gmra.mxu0 %v325
      %v396 = vpop.f32.mrf.mxu0
      %v397 = vadd.f32 %v321, %v396
      %v398 = vpop.f32.mrf.mxu0
      %399 = vdwg.mxu0
      %v401 = vrot.slane %v397, 2
      %v403 = vadd.f32 %v397, %v401
      %v404 = vxor.u32 %v403, 2147483648
      %v405 = vmul.f32 %v404, 1.442695
      %v406 = vpow.pop %v405
      %v407 = vadd.f32 %v406, 1.0
      %v408 = vrcp.pop %v407
      %v409 = vmul.f32 1.0, %v408
      %410 = vst.msk [vmem:[#allocation7] sm:$0x3] %vm141, %v409
    $region33: #{tpu_custom_call.1} parent=1 // pred_fallthru
      _
    // Predicated region
    $region34: #{tpu_custom_call.1} parent=1 // pred_check
      _
    $region35: #{tpu_custom_call.1} parent=1 // pred_check_branch
      %412 = sbr.rel (0) target = $region37
    $region36: #{tpu_custom_call.1} parent=1 // pred_region
      %s414 = ssub.s32 32, 32
      %415 = vsyncadd [#allocation6], %s414
      %s417 = sshll.u32 [#allocation7], 4
      %s418 = int_to_ptr.vmem [resolvable:$true] %s417
      %420 = dma.vmem_to_hbm [thread:$0]  %s418, 32, %s5, [#allocation6]
    $region37: #{tpu_custom_call.1} parent=1 // pred_fallthru
      _
    // Predicated region
    $region38: #{tpu_custom_call.1} parent=1 // pred_check
      _
    $region39: #{tpu_custom_call.1} parent=1 // pred_check_branch
      %422 = sbr.rel (0) target = $region41
    $region40: #{tpu_custom_call.1} parent=1 // pred_region
      %423 = dma.done [#allocation6], 32
    $region41: #{tpu_custom_call.1} parent=1 // pred_fallthru
      _
    %424 = vsyncpa [#allocation5], 1
    %425 = vsyncpa [#allocation6], 1

</llo_original>
